<compile_context>
chip_gen: v7x
topology: tpu7x:2x2x1
jax: 0.10.0
libtpu: 0.0.40
codegen_flags: <defaults>
</compile_context>

<pallas_src>
import functools
import math

import jax
import jax.numpy as jnp
from jax.experimental import pallas as pl
from jax.experimental.pallas import tpu as pltpu


def _encoder_layer_kernel(a2_ref, b2_ref, x_ref, o_ref, *, eps):
    # a2_ref, b2_ref: (1, D)   LayerNorm scale / shift (constant across the grid)
    # x_ref, o_ref:   (TB, S, D) block of the input / output
    x = x_ref[...].astype(jnp.float32)          # (TB, S, D)
    a2 = a2_ref[...].astype(jnp.float32)        # (1, D) — broadcasts over (TB, S, D)
    b2 = b2_ref[...].astype(jnp.float32)

    d = x.shape[-1]

    # ---- LayerNorm (torch: x.std(-1) is unbiased (ddof=1); eps added to std) ----
    mean = jnp.mean(x, axis=-1, keepdims=True)
    xc = x - mean
    var = jnp.sum(xc * xc, axis=-1, keepdims=True) * (1.0 / (d - 1))
    std = jnp.sqrt(var)
    y = a2 * (xc / (std + eps)) + b2            # (TB, S, D)

    # ---- single-head scaled-dot-product self-attention, q = k = v = y ----
    # TODO(synk): `self_attn` is dependency-injected in the PyTorch module and not
    # defined in the spec; implemented here as the canonical attention(q,k,v).
    scores = jnp.einsum(
        "bqd,bkd->bqk", y, y, preferred_element_type=jnp.float32
    ) * (1.0 / math.sqrt(d))                    # (TB, S, S)
    m = jnp.max(scores, axis=-1, keepdims=True)
    e = jnp.exp(scores - m)
    denom = jnp.sum(e, axis=-1, keepdims=True)
    p = e * pl.reciprocal(denom, approx=True)   # EUP reciprocal — free bundle slot
    attn = jnp.einsum(
        "bqk,bkd->bqd", p, y, preferred_element_type=jnp.float32
    )                                           # (TB, S, D)

    # ---- residual add (nn.Dropout is identity at inference) ----
    o_ref[...] = (x + attn).astype(o_ref.dtype)


def encoder_layer_attention(x, a_2, b_2, *, eps=1e-6, block_b=None):
    """x: (B, S, D); a_2, b_2: (D,). Returns (B, S, D)."""
    B, S, D = x.shape

    if block_b is None:
        # Batch as many rows per grid step as fit a conservative VMEM budget:
        # in block + out block (double-buffered) + (S,S) scores, all f32.
        per_b_bytes = (2 * 2 * S * D + S * S) * 4
        budget = 8 * 1024 * 1024                 # well under v7x's 64 MiB VMEM
        block_b = max(1, min(B, budget // max(per_b_bytes, 1), 64))

    n_blocks = pl.cdiv(B, block_b)
    Bp = n_blocks * block_b
    if Bp != B:
        # Zero-pad the batch tail (no runtime OOB checks on VMEM refs); padded
        # rows produce finite garbage that is sliced off below.
        x = jnp.pad(x, ((0, Bp - B), (0, 0), (0, 0)))

    a2 = a_2.reshape(1, D).astype(x.dtype)
    b2 = b_2.reshape(1, D).astype(x.dtype)

    out = pl.pallas_call(
        functools.partial(_encoder_layer_kernel, eps=eps),
        out_shape=jax.ShapeDtypeStruct((Bp, S, D), x.dtype),
        grid_spec=pltpu.PrefetchScalarGridSpec(
            num_scalar_prefetch=0,
            grid=(n_blocks,),
            in_specs=[
                pl.BlockSpec((1, D), lambda b: (0, 0)),              # a_2 (resident)
                pl.BlockSpec((1, D), lambda b: (0, 0)),              # b_2 (resident)
                pl.BlockSpec((block_b, S, D), lambda b: (b, 0, 0)),  # x block
            ],
            out_specs=pl.BlockSpec((block_b, S, D), lambda b: (b, 0, 0)),
        ),
        compiler_params=pltpu.CompilerParams(
            dimension_semantics=("parallel",),
            vmem_limit_bytes=64 * 1024 * 1024,
        ),
    )(a2, b2, x)

    return out[:B]


def _ref_forward(x, a_2, b_2, eps=1e-6):
    """Pure-JAX reference of the PyTorch forward (eval mode)."""
    mean = jnp.mean(x, axis=-1, keepdims=True)
    std = jnp.std(x, axis=-1, keepdims=True, ddof=1)     # torch unbiased std
    y = a_2 * (x - mean) / (std + eps) + b_2
    d = x.shape[-1]
    scores = jnp.einsum("bqd,bkd->bqk", y, y) / jnp.sqrt(jnp.float32(d))
    p = jax.nn.softmax(scores, axis=-1)
    attn = jnp.einsum("bqk,bkd->bqd", p, y)
    return x + attn


if __name__ == "__main__":
    # Small shapes consistent with the module: batch=6, seq=16, size(d_model)=128.
    B, S, D = 6, 16, 128

    key = jax.random.PRNGKey(0)
    x = jax.random.normal(key, (B, S, D), dtype=jnp.float32)

    # LayerNorm parameters at their deterministic init (ones / zeros).
    a_2 = jnp.ones((D,), dtype=jnp.float32)
    b_2 = jnp.zeros((D,), dtype=jnp.float32)

    # block_b=4 with B=6 exercises the padded-tail path (grid of 2 steps).
    out = encoder_layer_attention(x, a_2, b_2, block_b=4)
    out = jax.block_until_ready(out)

    ref = _ref_forward(x, a_2, b_2)
    assert out.shape == (B, S, D)
    assert jnp.allclose(out, ref, atol=2e-3, rtol=2e-3), float(
        jnp.max(jnp.abs(out - ref))
    )

    print("KERNEL_OK")
</pallas_src>

<mosaic_0001>
module attributes {stable_mosaic.version = 11 : i64} {
  func.func @_encoder_layer_kernel(%arg0: i32, %arg1: memref<1x128xf32, #tpu.memory_space<vmem>>, %arg2: memref<1x128xf32, #tpu.memory_space<vmem>>, %arg3: memref<4x16x128xf32, #tpu.memory_space<vmem>>, %arg4: memref<4x16x128xf32, #tpu.memory_space<vmem>>) attributes {dimension_semantics = [#tpu.dimension_semantics<parallel>], iteration_bounds = array<i64: 2>, scalar_prefetch = 0 : i64, scratch_operands = 0 : i64, tpu.core_type = #tpu.core_type<tc>, window_params = [{pipeline_mode = #tpu.pipeline_mode<synchronous>, transform_indices = @transform_0, window_bounds = array<i64: 1, 128>}, {pipeline_mode = #tpu.pipeline_mode<synchronous>, transform_indices = @transform_1, window_bounds = array<i64: 1, 128>}, {transform_indices = @transform_2, window_bounds = array<i64: 4, 16, 128>}, {transform_indices = @transform_3, window_bounds = array<i64: 4, 16, 128>}]} {
    %c0 = arith.constant 0 : index
    %c0_0 = arith.constant 0 : index
    %c0_1 = arith.constant 0 : index
    %0 = vector.load %arg3[%c0, %c0_0, %c0_1] : memref<4x16x128xf32, #tpu.memory_space<vmem>>, vector<4x16x128xf32>
    %c0_2 = arith.constant 0 : index
    %c0_3 = arith.constant 0 : index
    %1 = vector.load %arg1[%c0_2, %c0_3] : memref<1x128xf32, #tpu.memory_space<vmem>>, vector<1x128xf32>
    %c0_4 = arith.constant 0 : index
    %c0_5 = arith.constant 0 : index
    %2 = vector.load %arg2[%c0_4, %c0_5] : memref<1x128xf32, #tpu.memory_space<vmem>>, vector<1x128xf32>
    %cst = arith.constant dense<0.000000e+00> : vector<4x16xf32>
    %3 = vector.multi_reduction <add>, %0, %cst [2] : vector<4x16x128xf32> to vector<4x16xf32>
    %4 = vector.shape_cast %3 : vector<4x16xf32> to vector<4x16x1xf32>
    %cst_6 = arith.constant 1.280000e+02 : f32
    %5 = vector.broadcast %cst_6 : f32 to vector<4x16x1xf32>
    %6 = arith.divf %4, %5 : vector<4x16x1xf32>
    %7 = vector.broadcast %6 : vector<4x16x1xf32> to vector<4x16x128xf32>
    %8 = arith.subf %0, %7 : vector<4x16x128xf32>
    %9 = arith.mulf %8, %8 : vector<4x16x128xf32>
    %cst_7 = arith.constant dense<0.000000e+00> : vector<4x16xf32>
    %10 = vector.multi_reduction <add>, %9, %cst_7 [2] : vector<4x16x128xf32> to vector<4x16xf32>
    %11 = vector.shape_cast %10 : vector<4x16xf32> to vector<4x16x1xf32>
    %cst_8 = arith.constant 0.00787401571 : f32
    %12 = vector.broadcast %cst_8 : f32 to vector<4x16x1xf32>
    %13 = arith.mulf %11, %12 : vector<4x16x1xf32>
    %14 = math.sqrt %13 : vector<4x16x1xf32>
    %cst_9 = arith.constant 9.99999997E-7 : f32
    %15 = vector.broadcast %cst_9 : f32 to vector<4x16x1xf32>
    %16 = arith.addf %14, %15 : vector<4x16x1xf32>
    %17 = vector.broadcast %16 : vector<4x16x1xf32> to vector<4x16x128xf32>
    %18 = arith.divf %8, %17 : vector<4x16x128xf32>
    %19 = vector.shape_cast %1 : vector<1x128xf32> to vector<1x1x128xf32>
    %20 = vector.broadcast %19 : vector<1x1x128xf32> to vector<4x16x128xf32>
    %21 = arith.mulf %20, %18 : vector<4x16x128xf32>
    %22 = vector.shape_cast %2 : vector<1x128xf32> to vector<1x1x128xf32>
    %23 = vector.broadcast %22 : vector<1x1x128xf32> to vector<4x16x128xf32>
    %24 = arith.addf %21, %23 : vector<4x16x128xf32>
    "tpu.trace_start"() <{level = 10 : i32, message = "bqd,bkd->bqk"}> : () -> ()
    %cst_10 = arith.constant dense<0.000000e+00> : vector<4x16x16xf32>
    %25 = tpu.matmul %24, %24, %cst_10 {dimension_numbers = #tpu.dot_dimension_numbers<[2], [2], [1], [1], [0, 0, 0, 1, 1, 1], [0], [0]>} : vector<4x16x128xf32>, vector<4x16x128xf32>, vector<4x16x16xf32> -> vector<4x16x16xf32>
    "tpu.trace_stop"() : () -> ()
    %cst_11 = arith.constant 0.0883883461 : f32
    %26 = vector.broadcast %cst_11 : f32 to vector<4x16x16xf32>
    %27 = arith.mulf %25, %26 : vector<4x16x16xf32>
    %cst_12 = arith.constant dense<0xFF800000> : vector<4x16xf32>
    %28 = vector.multi_reduction <maximumf>, %27, %cst_12 [2] : vector<4x16x16xf32> to vector<4x16xf32>
    %29 = vector.shape_cast %28 : vector<4x16xf32> to vector<4x16x1xf32>
    %30 = vector.broadcast %29 : vector<4x16x1xf32> to vector<4x16x16xf32>
    %31 = arith.subf %27, %30 : vector<4x16x16xf32>
    %32 = math.exp %31 : vector<4x16x16xf32>
    %cst_13 = arith.constant dense<0.000000e+00> : vector<4x16xf32>
    %33 = vector.multi_reduction <add>, %32, %cst_13 [2] : vector<4x16x16xf32> to vector<4x16xf32>
    %34 = vector.shape_cast %33 : vector<4x16xf32> to vector<4x16x1xf32>
    %35 = tpu.reciprocal %34 {approx = true} : vector<4x16x1xf32> -> vector<4x16x1xf32>
    %36 = vector.broadcast %35 : vector<4x16x1xf32> to vector<4x16x16xf32>
    %37 = arith.mulf %32, %36 : vector<4x16x16xf32>
    "tpu.trace_start"() <{level = 10 : i32, message = "bqk,bkd->bqd"}> : () -> ()
    %cst_14 = arith.constant dense<0.000000e+00> : vector<4x16x128xf32>
    %38 = tpu.matmul %37, %24, %cst_14 {dimension_numbers = #tpu.dot_dimension_numbers<[2], [1], [1], [2], [0, 0, 0, 1, 1, 2], [0], [0]>} : vector<4x16x16xf32>, vector<4x16x128xf32>, vector<4x16x128xf32> -> vector<4x16x128xf32>
    "tpu.trace_stop"() : () -> ()
    %39 = arith.addf %0, %38 : vector<4x16x128xf32>
    %c0_15 = arith.constant 0 : index
    %c0_16 = arith.constant 0 : index
    %c0_17 = arith.constant 0 : index
    %40 = vector.load %arg4[%c0_15, %c0_16, %c0_17] : memref<4x16x128xf32, #tpu.memory_space<vmem>>, vector<4x16x128xf32>
    tpu.vector_store %arg4[%c0_15, %c0_16, %c0_17], %39 {strides = array<i32>} : memref<4x16x128xf32, #tpu.memory_space<vmem>>, vector<4x16x128xf32>,
    return
  }
  func.func @transform_0(%arg0: i32) -> (i32, i32) {
    %c0_i32 = arith.constant 0 : i32
    %c0_i32_0 = arith.constant 0 : i32
    %c0_i32_1 = arith.constant 0 : i32
    return %c0_i32, %c0_i32_0 : i32, i32
  }
  func.func @transform_1(%arg0: i32) -> (i32, i32) {
    %c0_i32 = arith.constant 0 : i32
    %c0_i32_0 = arith.constant 0 : i32
    %c0_i32_1 = arith.constant 0 : i32
    return %c0_i32, %c0_i32_0 : i32, i32
  }
  func.func @transform_2(%arg0: i32) -> (i32, i32, i32) {
    %c0_i32 = arith.constant 0 : i32
    %c0_i32_0 = arith.constant 0 : i32
    %c0_i32_1 = arith.constant 0 : i32
    return %arg0, %c0_i32, %c0_i32_0 : i32, i32, i32
  }
  func.func @transform_3(%arg0: i32) -> (i32, i32, i32) {
    %c0_i32 = arith.constant 0 : i32
    %c0_i32_0 = arith.constant 0 : i32
    %c0_i32_1 = arith.constant 0 : i32
    return %arg0, %c0_i32, %c0_i32_0 : i32, i32, i32
  }
}

</mosaic_0001>

<llo_original>
// kernel: tpu_custom_call.1
$region0: #{tpu_custom_call.1}
  #allocation0 [shape = 'u32[]', space=smem, size = 0x4, offset = 0x4, fixed_abs, tag = 'smem constant byte address 0x4 - core index']
  #allocation1 [shape = 'u32[144,128]{1,0:T(1,128)}', space=vmem, size = 0x12000, scoped, tag = 'internal scratch']
  %s0 = inlined_call_operand.hbm [shape: f32[1,128], index: 0, kind: input, shape index: {}]
  %s1 = inlined_call_operand.hbm [shape: f32[1,128], index: 1, kind: input, shape index: {}]
  %s2 = inlined_call_operand.hbm [shape: f32[8,16,128], index: 2, kind: input, shape index: {}]
  %s3 = inlined_call_operand.hbm [shape: f32[8,16,128], index: 3, kind: output, shape index: {}]
  %s4 = sld [smem:[#allocation0]]
  $region57: #{tpu_custom_call.1} parent=0
    _
  %s6 = ssub.s32 1, %s4
  %s7 = scalar_select 0, %s6, %s4
  $region1: #{tpu_custom_call.1} parent=0
    #allocation2 [shape = 'u8[512]{0}', space=vmem, size = 0x400, scoped, tag = 'input window, operand 0, single buffered']
    #allocation3 [shape = 's32[2]{0}', space=sflag, size = 0x8, scoped, tag = 'scoped memory for tpu_custom_call.1']
    #allocation4 [shape = 's32[2]{0}', space=sflag, size = 0x8, scoped, tag = 'scoped memory for tpu_custom_call.1']
    #allocation5 [shape = 'u8[512]{0}', space=vmem, size = 0x400, scoped, tag = 'input window, operand 1, single buffered']
    #allocation6 [shape = 's32[1]{0}', space=sflag, size = 0x4, scoped, tag = 'scoped memory for tpu_custom_call.1']
    #allocation7 [shape = 'u8[65536]{0}', space=vmem, size = 0x10000, scoped, tag = 'input window, operand 2']
    #allocation8 [shape = 'u8[65536]{0}', space=vmem, size = 0x10000, scoped, tag = 'output window, operand 0']
    %8 = vsyncpa [#allocation3], 0
    %9 = vsyncpa [#allocation6], 0
    %10 = vsyncpa [#allocation4], 0
    %s11 = scalar_lea.sflag [#allocation4], 1
    %12 = vsyncpa %s11, 0
    loop: start=0, step=1, limit=4
    $region2: #{tpu_custom_call.1} parent=1 // loop_pre_header
      _
    $region3: #{tpu_custom_call.1} parent=1 // loop_header
      %s14 = sphi 0, %s18
      %p15 = scmp.ge.s32.totalorder %s14, 4
      %s22 = sphi 0, %s22
      %s24 = sphi 0, %s22
      %s25 = sphi 0, %s24
      %s39 = sphi 0, %s25
      %s43 = sphi 0, %s43
      %s45 = sphi 0, %s43
      %s46 = sphi 0, %s45
      %s60 = sphi 0, %s46
      %s66 = sphi 0, %s68
      %s69 = sphi 0, %s66
      %s70 = sphi 0, %s69
      %s86 = sphi 0, %s70
      %s92 = sphi 0, %s94
      %s95 = sphi 0, %s92
      %s96 = sphi 0, %s95
      %s112 = sphi 0, %s96
    $region4: #{tpu_custom_call.1} parent=1 // loop_header_branch
      %17 = sbr.rel (%p15) target = $region8
    $region5: #{tpu_custom_call.1} parent=1 // loop_body
      %s19 = ssub.s32 %s14, 1
      %s20 = ssub.s32 %s14, 2
      %s21 = sadd.s32 %s14, 1
      %s23 = sadd.s32 %s22, 1
      %p26 = scmp.eq.s32.totalorder %s14, 1
      %p27 = scmp.ne.s32.totalorder %s22, %s24
      %p28 = scmp.eq.s32.totalorder %s14, 0
      %p29 = por %p27, %p28
      %p30 = scmp.ne.s32.totalorder %s22, %s24
      %p31 = scmp.eq.s32.totalorder %s19, 1
      %p32 = por %p30, %p31
      %p33 = scmp.ne.s32.totalorder %s24, %s25
      %p34 = scmp.eq.s32.totalorder %s19, 0
      %p35 = por %p33, %p34
      %p36 = scmp.ne.s32.totalorder %s24, %s25
      %p37 = scmp.eq.s32.totalorder %s20, 1
      %p38 = por %p36, %p37
      %p40 = scmp.ne.s32.totalorder %s25, %s39
      %p41 = scmp.eq.s32.totalorder %s20, 0
      %p42 = por %p40, %p41
      %s44 = sadd.s32 %s43, 1
      %p47 = scmp.eq.s32.totalorder %s14, 1
      %p48 = scmp.ne.s32.totalorder %s43, %s45
      %p49 = scmp.eq.s32.totalorder %s14, 0
      %p50 = por %p48, %p49
      %p51 = scmp.ne.s32.totalorder %s43, %s45
      %p52 = scmp.eq.s32.totalorder %s19, 1
      %p53 = por %p51, %p52
      %p54 = scmp.ne.s32.totalorder %s45, %s46
      %p55 = scmp.eq.s32.totalorder %s19, 0
      %p56 = por %p54, %p55
      %p57 = scmp.ne.s32.totalorder %s45, %s46
      %p58 = scmp.eq.s32.totalorder %s20, 1
      %p59 = por %p57, %p58
      %p61 = scmp.ne.s32.totalorder %s46, %s60
      %p62 = scmp.eq.s32.totalorder %s20, 0
      %p63 = por %p61, %p62
      %s64 = ssub.s32 %s14, %s21
      %p65 = scmp.eq.s32.totalorder %s64, 0
      %s67 = sadd.s32 %s66, 1
      %s68 = scalar_select %p65, %s66, %s67
      %p71 = pneg %p65
      %p72 = scmp.eq.s32.totalorder %s14, 1
      %p73 = por %p71, %p72
      %p74 = scmp.ne.s32.totalorder %s66, %s69
      %p75 = scmp.eq.s32.totalorder %s14, 0
      %p76 = por %p74, %p75
      %p77 = scmp.ne.s32.totalorder %s66, %s69
      %p78 = scmp.eq.s32.totalorder %s19, 1
      %p79 = por %p77, %p78
      %p80 = scmp.ne.s32.totalorder %s69, %s70
      %p81 = scmp.eq.s32.totalorder %s19, 0
      %p82 = por %p80, %p81
      %p83 = scmp.ne.s32.totalorder %s69, %s70
      %p84 = scmp.eq.s32.totalorder %s20, 1
      %p85 = por %p83, %p84
      %p87 = scmp.ne.s32.totalorder %s70, %s86
      %p88 = scmp.eq.s32.totalorder %s20, 0
      %p89 = por %p87, %p88
      %s90 = ssub.s32 %s14, %s21
      %p91 = scmp.eq.s32.totalorder %s90, 0
      %s93 = sadd.s32 %s92, 1
      %s94 = scalar_select %p91, %s92, %s93
      %p97 = pneg %p91
      %p98 = scmp.eq.s32.totalorder %s14, 1
      %p99 = por %p97, %p98
      %p100 = scmp.ne.s32.totalorder %s92, %s95
      %p101 = scmp.eq.s32.totalorder %s14, 0
      %p102 = por %p100, %p101
      %p103 = scmp.ne.s32.totalorder %s92, %s95
      %p104 = scmp.eq.s32.totalorder %s19, 1
      %p105 = por %p103, %p104
      %p106 = scmp.ne.s32.totalorder %s95, %s96
      %p107 = scmp.eq.s32.totalorder %s19, 0
      %p108 = por %p106, %p107
      %p109 = scmp.ne.s32.totalorder %s95, %s96
      %p110 = scmp.eq.s32.totalorder %s20, 1
      %p111 = por %p109, %p110
      %p113 = scmp.ne.s32.totalorder %s96, %s112
      %p114 = scmp.eq.s32.totalorder %s20, 0
      %p115 = por %p113, %p114
      %p116 = scmp.le.s32.totalorder 1, %s14
      %p117 = scmp.lt.s32.totalorder %s14, 3
      %p118 = pnand %p116, %p117
      %p119 = pneg %p118
      // Predicated region
      $region9: #{tpu_custom_call.1} parent=5 // pred_check
        _
      $region10: #{tpu_custom_call.1} parent=5 // pred_check_branch
        %121 = sbr.rel (%p118) target = $region12
      $region11: #{tpu_custom_call.1} parent=5 // pred_region
        %s122 = ssub.s32 %s14, 1
        // Predicated region
        $region13: #{tpu_custom_call.1} parent=11 // pred_check
          %p123 = pneg %p35
        $region14: #{tpu_custom_call.1} parent=11 // pred_check_branch
          %125 = sbr.rel (%p123) target = $region16
        $region15: #{tpu_custom_call.1} parent=11 // pred_region
          %s127 = ssub.s32 16, 16
          %128 = vsyncadd [#allocation3], %s127
          %s130 = sshll.u32 [#allocation2], 4
          %s131 = int_to_ptr.vmem [resolvable:$true] %s130
          %133 = dma.hbm_to_vmem [thread:$0]  %s0, 16, %s131, [#allocation3]
        $region16: #{tpu_custom_call.1} parent=11 // pred_fallthru
          _
        // Predicated region
        $region17: #{tpu_custom_call.1} parent=11 // pred_check
          %p134 = pneg %p56
        $region18: #{tpu_custom_call.1} parent=11 // pred_check_branch
          %136 = sbr.rel (%p134) target = $region20
        $region19: #{tpu_custom_call.1} parent=11 // pred_region
          %s138 = ssub.s32 16, 16
          %139 = vsyncadd [#allocation6], %s138
          %s141 = sshll.u32 [#allocation5], 4
          %s142 = int_to_ptr.vmem [resolvable:$true] %s141
          %144 = dma.hbm_to_vmem [thread:$0]  %s1, 16, %s142, [#allocation6]
        $region20: #{tpu_custom_call.1} parent=11 // pred_fallthru
          _
      $region12: #{tpu_custom_call.1} parent=5 // pred_fallthru
        _
      %p145 = scmp.lt.s32.totalorder %s14, 2
      // Predicated region
      $region21: #{tpu_custom_call.1} parent=5 // pred_check
        %p146 = pneg %p145
      $region22: #{tpu_custom_call.1} parent=5 // pred_check_branch
        %148 = sbr.rel (%p146) target = $region24
      $region23: #{tpu_custom_call.1} parent=5 // pred_region
        // Predicated region
        $region25: #{tpu_custom_call.1} parent=23 // pred_check
          %p149 = pneg %p76
        $region26: #{tpu_custom_call.1} parent=23 // pred_check_branch
          %151 = sbr.rel (%p149) target = $region28
        $region27: #{tpu_custom_call.1} parent=23 // pred_region
          %s152 = sand.u32 %s14, 1
          %s153 = scalar_lea.sflag [#allocation3], %s152
          %s154 = sand.u32 %s66, 1
          %s155 = smul.addr %s154, 64
          %s156 = scalar_lea.vmem [#allocation7], %s155
          %s157 = smul.u32 4, %s14
          %s159 = ssub.s32 1024, 1024
          %160 = vsyncadd %s153, %s159
          %s161 = smul.addr %s157, 2
          %s162 = smul.addr %s161, 128
          %s163 = scalar_lea.hbm %s2, %s162
          %s164 = sshll.u32 %s156, 4
          %s165 = int_to_ptr.vmem [resolvable:$true] %s164
          %170 = dma.hbm_to_vmem [thread:$0]  %s163, 1024, %s165, %s153, 128, 128, 8
        $region28: #{tpu_custom_call.1} parent=23 // pred_fallthru
          _
      $region24: #{tpu_custom_call.1} parent=5 // pred_fallthru
        _
      %p171 = scmp.le.s32.totalorder 1, %s14
      %p172 = scmp.lt.s32.totalorder %s14, 3
      %p173 = pnand %p171, %p172
      %p174 = pneg %p173
      // Predicated region
      $region29: #{tpu_custom_call.1} parent=5 // pred_check
        _
      $region30: #{tpu_custom_call.1} parent=5 // pred_check_branch
        %176 = sbr.rel (%p173) target = $region32
      $region31: #{tpu_custom_call.1} parent=5 // pred_region
        %s177 = ssub.s32 %s14, 1
        // Predicated region
        $region33: #{tpu_custom_call.1} parent=31 // pred_check
          %p178 = pneg %p35
        $region34: #{tpu_custom_call.1} parent=31 // pred_check_branch
          %180 = sbr.rel (%p178) target = $region36
        $region35: #{tpu_custom_call.1} parent=31 // pred_region
          %181 = dma.done [#allocation3], 16
        $region36: #{tpu_custom_call.1} parent=31 // pred_fallthru
          _
        // Predicated region
        $region37: #{tpu_custom_call.1} parent=31 // pred_check
          %p182 = pneg %p56
        $region38: #{tpu_custom_call.1} parent=31 // pred_check_branch
          %184 = sbr.rel (%p182) target = $region40
        $region39: #{tpu_custom_call.1} parent=31 // pred_region
          %185 = dma.done [#allocation6], 16
        $region40: #{tpu_custom_call.1} parent=31 // pred_fallthru
          _
        %s186 = sand.u32 %s19, 1
        %s187 = scalar_lea.sflag [#allocation3], %s186
        %s188 = sand.u32 %s69, 1
        %s189 = smul.addr %s188, 64
        %s190 = scalar_lea.vmem [#allocation7], %s189
        // Predicated region
        $region41: #{tpu_custom_call.1} parent=31 // pred_check
          %p191 = pneg %p82
        $region42: #{tpu_custom_call.1} parent=31 // pred_check_branch
          %193 = sbr.rel (%p191) target = $region44
        $region43: #{tpu_custom_call.1} parent=31 // pred_region
          %194 = dma.done %s187, 1024
        $region44: #{tpu_custom_call.1} parent=31 // pred_fallthru
          _
        %p195 = pneg %p35
        %p196 = pneg %p32
        %p197 = pneg %p56
        %p198 = pneg %p53
        %s199 = sand.u32 %s19, 1
        %s200 = scalar_lea.sflag [#allocation3], %s199
        %s201 = sand.u32 %s69, 1
        %s202 = smul.addr %s201, 64
        %s203 = scalar_lea.vmem [#allocation7], %s202
        %p204 = pneg %p82
        %p205 = pneg %p79
        %p206 = pneg %p108
        %p207 = pneg %p105
        %s208 = sand.u32 %s95, 1
        %s209 = scalar_lea.sflag [#allocation4], %s208
        %s210 = sand.u32 %s95, 1
        %s211 = smul.addr %s210, 64
        %s212 = scalar_lea.vmem [#allocation8], %s211
        %s213 = smul.u32 4, %s19
        %s214 = smul.u32 4, %s19
        %v215 = vld [vmem:[%s190] sm:$0xff]
        %v216 = vld [vmem:[%s190 + $0x8] sm:$0xff]
        %v217 = vld [vmem:[%s190 + $0x10] sm:$0xff]
        %v218 = vld [vmem:[%s190 + $0x18] sm:$0xff]
        %v219 = vld [vmem:[%s190 + $0x20] sm:$0xff]
        %v220 = vld [vmem:[%s190 + $0x28] sm:$0xff]
        %v221 = vld [vmem:[%s190 + $0x30] sm:$0xff]
        %v222 = vld [vmem:[%s190 + $0x38] sm:$0xff]
        %v223 = vld [vmem:[#allocation2] sm:$0x1]
        %v224 = vld [vmem:[#allocation5] sm:$0x1]
        %225 = vadd.xlane.f32.xlu0 %v215
        %v226 = vpop.xlane.xlu0 %225
        %227 = vadd.xlane.f32.xlu0 %v216
        %v228 = vpop.xlane.xlu0 %227
        %229 = vadd.xlane.f32.xlu0 %v217
        %v230 = vpop.xlane.xlu0 %229
        %231 = vadd.xlane.f32.xlu0 %v218
        %v232 = vpop.xlane.xlu0 %231
        %233 = vadd.xlane.f32.xlu0 %v219
        %v234 = vpop.xlane.xlu0 %233
        %235 = vadd.xlane.f32.xlu0 %v220
        %v236 = vpop.xlane.xlu0 %235
        %237 = vadd.xlane.f32.xlu0 %v221
        %v238 = vpop.xlane.xlu0 %237
        %239 = vadd.xlane.f32.xlu0 %v222
        %v240 = vpop.xlane.xlu0 %239
        %v241 = vrcp.pop 128.0
        %v242 = vmul.f32 %v226, %v241
        %v243 = vmul.f32 %v228, %v241
        %v244 = vmul.f32 %v230, %v241
        %v245 = vmul.f32 %v232, %v241
        %v246 = vmul.f32 %v234, %v241
        %v247 = vmul.f32 %v236, %v241
        %v248 = vmul.f32 %v238, %v241
        %v249 = vmul.f32 %v240, %v241
        %v250 = vsub.f32 %v215, %v242
        %v251 = vsub.f32 %v216, %v243
        %v252 = vsub.f32 %v217, %v244
        %v253 = vsub.f32 %v218, %v245
        %v254 = vsub.f32 %v219, %v246
        %v255 = vsub.f32 %v220, %v247
        %v256 = vsub.f32 %v221, %v248
        %v257 = vsub.f32 %v222, %v249
        %v258 = vmul.f32 %v250, %v250
        %v259 = vmul.f32 %v251, %v251
        %v260 = vmul.f32 %v252, %v252
        %v261 = vmul.f32 %v253, %v253
        %v262 = vmul.f32 %v254, %v254
        %v263 = vmul.f32 %v255, %v255
        %v264 = vmul.f32 %v256, %v256
        %v265 = vmul.f32 %v257, %v257
        %266 = vadd.xlane.f32.xlu0 %v258
        %v267 = vpop.xlane.xlu0 %266
        %268 = vadd.xlane.f32.xlu0 %v259
        %v269 = vpop.xlane.xlu0 %268
        %270 = vadd.xlane.f32.xlu0 %v260
        %v271 = vpop.xlane.xlu0 %270
        %272 = vadd.xlane.f32.xlu0 %v261
        %v273 = vpop.xlane.xlu0 %272
        %274 = vadd.xlane.f32.xlu0 %v262
        %v275 = vpop.xlane.xlu0 %274
        %276 = vadd.xlane.f32.xlu0 %v263
        %v277 = vpop.xlane.xlu0 %276
        %278 = vadd.xlane.f32.xlu0 %v264
        %v279 = vpop.xlane.xlu0 %278
        %280 = vadd.xlane.f32.xlu0 %v265
        %v281 = vpop.xlane.xlu0 %280
        %v282 = vmul.f32 %v267, 0.007874016
        %v283 = vmul.f32 %v269, 0.007874016
        %v284 = vmul.f32 %v271, 0.007874016
        %v285 = vmul.f32 %v273, 0.007874016
        %v286 = vmul.f32 %v275, 0.007874016
        %v287 = vmul.f32 %v277, 0.007874016
        %v288 = vmul.f32 %v279, 0.007874016
        %v289 = vmul.f32 %v281, 0.007874016
        %v290 = vrsqrt.pop %v282
        %v291 = vmul.f32 %v282, %v290
        %vm292 = vcmp.eq.f32.partialorder %v282, inf
        %v293 = vsel %vm292, %v282, %v291
        %vm294 = vcmp.eq.f32.partialorder %v282, 0.0
        %v295 = vand.u32 %v282, 2147483648
        %v296 = vsel %vm294, %v295, %v293
        %v297 = vrsqrt.pop %v283
        %v298 = vmul.f32 %v283, %v297
        %vm299 = vcmp.eq.f32.partialorder %v283, inf
        %v300 = vsel %vm299, %v283, %v298
        %vm301 = vcmp.eq.f32.partialorder %v283, 0.0
        %v302 = vand.u32 %v283, 2147483648
        %v303 = vsel %vm301, %v302, %v300
        %v304 = vrsqrt.pop %v284
        %v305 = vmul.f32 %v284, %v304
        %vm306 = vcmp.eq.f32.partialorder %v284, inf
        %v307 = vsel %vm306, %v284, %v305
        %vm308 = vcmp.eq.f32.partialorder %v284, 0.0
        %v309 = vand.u32 %v284, 2147483648
        %v310 = vsel %vm308, %v309, %v307
        %v311 = vrsqrt.pop %v285
        %v312 = vmul.f32 %v285, %v311
        %vm313 = vcmp.eq.f32.partialorder %v285, inf
        %v314 = vsel %vm313, %v285, %v312
        %vm315 = vcmp.eq.f32.partialorder %v285, 0.0
        %v316 = vand.u32 %v285, 2147483648
        %v317 = vsel %vm315, %v316, %v314
        %v318 = vrsqrt.pop %v286
        %v319 = vmul.f32 %v286, %v318
        %vm320 = vcmp.eq.f32.partialorder %v286, inf
        %v321 = vsel %vm320, %v286, %v319
        %vm322 = vcmp.eq.f32.partialorder %v286, 0.0
        %v323 = vand.u32 %v286, 2147483648
        %v324 = vsel %vm322, %v323, %v321
        %v325 = vrsqrt.pop %v287
        %v326 = vmul.f32 %v287, %v325
        %vm327 = vcmp.eq.f32.partialorder %v287, inf
        %v328 = vsel %vm327, %v287, %v326
        %vm329 = vcmp.eq.f32.partialorder %v287, 0.0
        %v330 = vand.u32 %v287, 2147483648
        %v331 = vsel %vm329, %v330, %v328
        %v332 = vrsqrt.pop %v288
        %v333 = vmul.f32 %v288, %v332
        %vm334 = vcmp.eq.f32.partialorder %v288, inf
        %v335 = vsel %vm334, %v288, %v333
        %vm336 = vcmp.eq.f32.partialorder %v288, 0.0
        %v337 = vand.u32 %v288, 2147483648
        %v338 = vsel %vm336, %v337, %v335
        %v339 = vrsqrt.pop %v289
        %v340 = vmul.f32 %v289, %v339
        %vm341 = vcmp.eq.f32.partialorder %v289, inf
        %v342 = vsel %vm341, %v289, %v340
        %vm343 = vcmp.eq.f32.partialorder %v289, 0.0
        %v344 = vand.u32 %v289, 2147483648
        %v345 = vsel %vm343, %v344, %v342
        %v346 = vadd.f32 %v296, 1e-06
        %v347 = vadd.f32 %v303, 1e-06
        %v348 = vadd.f32 %v310, 1e-06
        %v349 = vadd.f32 %v317, 1e-06
        %v350 = vadd.f32 %v324, 1e-06
        %v351 = vadd.f32 %v331, 1e-06
        %v352 = vadd.f32 %v338, 1e-06
        %v353 = vadd.f32 %v345, 1e-06
        %v354 = vrcp.pop %v346
        %v355 = vmul.f32 %v250, %v354
        %v356 = vrcp.pop %v347
        %v357 = vmul.f32 %v251, %v356
        %v358 = vrcp.pop %v348
        %v359 = vmul.f32 %v252, %v358
        %v360 = vrcp.pop %v349
        %v361 = vmul.f32 %v253, %v360
        %v362 = vrcp.pop %v350
        %v363 = vmul.f32 %v254, %v362
        %v364 = vrcp.pop %v351
        %v365 = vmul.f32 %v255, %v364
        %v366 = vrcp.pop %v352
        %v367 = vmul.f32 %v256, %v366
        %v368 = vrcp.pop %v353
        %v369 = vmul.f32 %v257, %v368
        %v371 = vlaneseq
        %v372 = vshrl.u32 %v371, 7
        %v373 = vsub.s32 0, %v372
        %v374 = vrot.slane %v223, %v373
        %v376 = vmul.f32 %v374, %v355
        %v377 = vmul.f32 %v374, %v357
        %v378 = vmul.f32 %v374, %v359
        %v379 = vmul.f32 %v374, %v361
        %v380 = vmul.f32 %v374, %v363
        %v381 = vmul.f32 %v374, %v365
        %v382 = vmul.f32 %v374, %v367
        %v383 = vmul.f32 %v374, %v369
        %v385 = vlaneseq
        %v386 = vshrl.u32 %v385, 7
        %v387 = vsub.s32 0, %v386
        %v388 = vrot.slane %v224, %v387
        %v390 = vadd.f32 %v376, %v388
        %v391 = vadd.f32 %v377, %v388
        %v392 = vadd.f32 %v378, %v388
        %v393 = vadd.f32 %v379, %v388
        %v394 = vadd.f32 %v380, %v388
        %v395 = vadd.f32 %v381, %v388
        %v396 = vadd.f32 %v382, %v388
        %v397 = vadd.f32 %v383, %v388
        %398 = vmatprep.subr.mxu0 0.0
        %399 = vmatpush1.xpose.msra.mxu0 %v390
        %400 = vmatprep.subr.mxu0 0.0
        %401 = vmatpush1.xpose.msra.mxu0 %v391
        %402 = vmatprep.subr.mxu0 0.0
        %403 = vmatpush1.xpose.msra.mxu0 0.0
        %404 = vmatprep.subr.mxu0 0.0
        %405 = vmatpush1.xpose.msra.mxu0 0.0
        %406 = vmatprep.subr.mxu0 0.0
        %407 = vmatpush1.xpose.msra.mxu0 0.0
        %408 = vmatprep.subr.mxu0 0.0
        %409 = vmatpush1.xpose.msra.mxu0 0.0
        %410 = vmatprep.subr.mxu0 0.0
        %411 = vmatpush1.xpose.msra.mxu0 0.0
        %412 = vmatprep.subr.mxu0 0.0
        %413 = vmatpush1.xpose.msra.mxu0 0.0
        %414 = vmatprep.subr.mxu0 0.0
        %415 = vmatpush1.xpose.msra.mxu0 0.0
        %416 = vmatprep.subr.mxu0 0.0
        %417 = vmatpush1.xpose.msra.mxu0 0.0
        %418 = vmatprep.subr.mxu0 0.0
        %419 = vmatpush1.xpose.msra.mxu0 0.0
        %420 = vmatprep.subr.mxu0 0.0
        %421 = vmatpush1.xpose.msra.mxu0 0.0
        %422 = vmatprep.subr.mxu0 0.0
        %423 = vmatpush1.xpose.msra.mxu0 0.0
        %424 = vmatprep.subr.mxu0 0.0
        %425 = vmatpush1.xpose.msra.mxu0 0.0
        %426 = vmatprep.subr.mxu0 0.0
        %427 = vmatpush1.xpose.msra.mxu0 0.0
        %428 = vmatprep.subr.mxu0 0.0
        %429 = vmatpush1.xpose.msra.mxu0 0.0
        %430 = vmatprep.subr.mxu0 0.0
        %431 = vmatpush1.xpose.msra.mxu0 0.0
        %432 = vmatprep.subr.mxu0 0.0
        %433 = vmatpush1.xpose.msra.mxu0 0.0
        %434 = vmatprep.subr.mxu0 0.0
        %435 = vmatpush1.xpose.msra.mxu0 0.0
        %436 = vmatprep.subr.mxu0 0.0
        %437 = vmatpush1.xpose.msra.mxu0 0.0
        %438 = vmatprep.subr.mxu0 0.0
        %439 = vmatpush1.xpose.msra.mxu0 0.0
        %440 = vmatprep.subr.mxu0 0.0
        %441 = vmatpush1.xpose.msra.mxu0 0.0
        %442 = vmatprep.subr.mxu0 0.0
        %443 = vmatpush1.xpose.msra.mxu0 0.0
        %444 = vmatprep.subr.mxu0 0.0
        %445 = vmatpush1.xpose.msra.mxu0 0.0
        %446 = vmatprep.subr.mxu0 0.0
        %447 = vmatpush1.xpose.msra.mxu0 0.0
        %448 = vmatprep.subr.mxu0 0.0
        %449 = vmatpush1.xpose.msra.mxu0 0.0
        %450 = vmatprep.subr.mxu0 0.0
        %451 = vmatpush1.xpose.msra.mxu0 0.0
        %452 = vmatprep.subr.mxu0 0.0
        %453 = vmatpush1.xpose.msra.mxu0 0.0
        %454 = vmatprep.subr.mxu0 0.0
        %455 = vmatpush1.xpose.msra.mxu0 0.0
        %456 = vmatprep.subr.mxu0 0.0
        %457 = vmatpush1.xpose.msra.mxu0 0.0
        %458 = vmatprep.subr.mxu0 0.0
        %459 = vmatpush1.xpose.msra.mxu0 0.0
        %460 = vmatprep.subr.mxu0 0.0
        %461 = vmatpush1.xpose.msra.mxu0 0.0
        %462 = vmatprep.mubr.f32.mxu0 0.0
        %463 = vmatmul.mubr.f32.gmra.mrb[0].mxu0 %v390
        %v464 = vpop.f32.mrb[0].mxu0
        %v465 = vadd.f32 0.0, %v464
        %v466 = vpop.f32.mrb[0].mxu0
        %467 = vmatprep.mubr.f32.mxu0 0.0
        %468 = vmatmul.mubr.f32.gmra.mrb[0].mxu0 %v391
        %v469 = vpop.f32.mrb[0].mxu0
        %v470 = vadd.f32 0.0, %v469
        %v471 = vpop.f32.mrb[0].mxu0
        %472 = vdwg.mxu0
        %473 = vmatprep.subr.mxu0 0.0
        %474 = vmatpush1.xpose.msra.mxu0 %v392
        %475 = vmatprep.subr.mxu0 0.0
        %476 = vmatpush1.xpose.msra.mxu0 %v393
        %477 = vmatprep.subr.mxu0 0.0
        %478 = vmatpush1.xpose.msra.mxu0 0.0
        %479 = vmatprep.subr.mxu0 0.0
        %480 = vmatpush1.xpose.msra.mxu0 0.0
        %481 = vmatprep.subr.mxu0 0.0
        %482 = vmatpush1.xpose.msra.mxu0 0.0
        %483 = vmatprep.subr.mxu0 0.0
        %484 = vmatpush1.xpose.msra.mxu0 0.0
        %485 = vmatprep.subr.mxu0 0.0
        %486 = vmatpush1.xpose.msra.mxu0 0.0
        %487 = vmatprep.subr.mxu0 0.0
        %488 = vmatpush1.xpose.msra.mxu0 0.0
        %489 = vmatprep.subr.mxu0 0.0
        %490 = vmatpush1.xpose.msra.mxu0 0.0
        %491 = vmatprep.subr.mxu0 0.0
        %492 = vmatpush1.xpose.msra.mxu0 0.0
        %493 = vmatprep.subr.mxu0 0.0
        %494 = vmatpush1.xpose.msra.mxu0 0.0
        %495 = vmatprep.subr.mxu0 0.0
        %496 = vmatpush1.xpose.msra.mxu0 0.0
        %497 = vmatprep.subr.mxu0 0.0
        %498 = vmatpush1.xpose.msra.mxu0 0.0
        %499 = vmatprep.subr.mxu0 0.0
        %500 = vmatpush1.xpose.msra.mxu0 0.0
        %501 = vmatprep.subr.mxu0 0.0
        %502 = vmatpush1.xpose.msra.mxu0 0.0
        %503 = vmatprep.subr.mxu0 0.0
        %504 = vmatpush1.xpose.msra.mxu0 0.0
        %505 = vmatprep.subr.mxu0 0.0
        %506 = vmatpush1.xpose.msra.mxu0 0.0
        %507 = vmatprep.subr.mxu0 0.0
        %508 = vmatpush1.xpose.msra.mxu0 0.0
        %509 = vmatprep.subr.mxu0 0.0
        %510 = vmatpush1.xpose.msra.mxu0 0.0
        %511 = vmatprep.subr.mxu0 0.0
        %512 = vmatpush1.xpose.msra.mxu0 0.0
        %513 = vmatprep.subr.mxu0 0.0
        %514 = vmatpush1.xpose.msra.mxu0 0.0
        %515 = vmatprep.subr.mxu0 0.0
        %516 = vmatpush1.xpose.msra.mxu0 0.0
        %517 = vmatprep.subr.mxu0 0.0
        %518 = vmatpush1.xpose.msra.mxu0 0.0
        %519 = vmatprep.subr.mxu0 0.0
        %520 = vmatpush1.xpose.msra.mxu0 0.0
        %521 = vmatprep.subr.mxu0 0.0
        %522 = vmatpush1.xpose.msra.mxu0 0.0
        %523 = vmatprep.subr.mxu0 0.0
        %524 = vmatpush1.xpose.msra.mxu0 0.0
        %525 = vmatprep.subr.mxu0 0.0
        %526 = vmatpush1.xpose.msra.mxu0 0.0
        %527 = vmatprep.subr.mxu0 0.0
        %528 = vmatpush1.xpose.msra.mxu0 0.0
        %529 = vmatprep.subr.mxu0 0.0
        %530 = vmatpush1.xpose.msra.mxu0 0.0
        %531 = vmatprep.subr.mxu0 0.0
        %532 = vmatpush1.xpose.msra.mxu0 0.0
        %533 = vmatprep.subr.mxu0 0.0
        %534 = vmatpush1.xpose.msra.mxu0 0.0
        %535 = vmatprep.subr.mxu0 0.0
        %536 = vmatpush1.xpose.msra.mxu0 0.0
        %537 = vmatprep.mubr.f32.mxu0 0.0
        %538 = vmatmul.mubr.f32.gmra.mrb[0].mxu0 %v392
        %v539 = vpop.f32.mrb[0].mxu0
        %v540 = vadd.f32 0.0, %v539
        %v541 = vpop.f32.mrb[0].mxu0
        %542 = vmatprep.mubr.f32.mxu0 0.0
        %543 = vmatmul.mubr.f32.gmra.mrb[0].mxu0 %v393
        %v544 = vpop.f32.mrb[0].mxu0
        %v545 = vadd.f32 0.0, %v544
        %v546 = vpop.f32.mrb[0].mxu0
        %547 = vdwg.mxu0
        %548 = vmatprep.subr.mxu0 0.0
        %549 = vmatpush1.xpose.msra.mxu0 %v394
        %550 = vmatprep.subr.mxu0 0.0
        %551 = vmatpush1.xpose.msra.mxu0 %v395
        %552 = vmatprep.subr.mxu0 0.0
        %553 = vmatpush1.xpose.msra.mxu0 0.0
        %554 = vmatprep.subr.mxu0 0.0
        %555 = vmatpush1.xpose.msra.mxu0 0.0
        %556 = vmatprep.subr.mxu0 0.0
        %557 = vmatpush1.xpose.msra.mxu0 0.0
        %558 = vmatprep.subr.mxu0 0.0
        %559 = vmatpush1.xpose.msra.mxu0 0.0
        %560 = vmatprep.subr.mxu0 0.0
        %561 = vmatpush1.xpose.msra.mxu0 0.0
        %562 = vmatprep.subr.mxu0 0.0
        %563 = vmatpush1.xpose.msra.mxu0 0.0
        %564 = vmatprep.subr.mxu0 0.0
        %565 = vmatpush1.xpose.msra.mxu0 0.0
        %566 = vmatprep.subr.mxu0 0.0
        %567 = vmatpush1.xpose.msra.mxu0 0.0
        %568 = vmatprep.subr.mxu0 0.0
        %569 = vmatpush1.xpose.msra.mxu0 0.0
        %570 = vmatprep.subr.mxu0 0.0
        %571 = vmatpush1.xpose.msra.mxu0 0.0
        %572 = vmatprep.subr.mxu0 0.0
        %573 = vmatpush1.xpose.msra.mxu0 0.0
        %574 = vmatprep.subr.mxu0 0.0
        %575 = vmatpush1.xpose.msra.mxu0 0.0
        %576 = vmatprep.subr.mxu0 0.0
        %577 = vmatpush1.xpose.msra.mxu0 0.0
        %578 = vmatprep.subr.mxu0 0.0
        %579 = vmatpush1.xpose.msra.mxu0 0.0
        %580 = vmatprep.subr.mxu0 0.0
        %581 = vmatpush1.xpose.msra.mxu0 0.0
        %582 = vmatprep.subr.mxu0 0.0
        %583 = vmatpush1.xpose.msra.mxu0 0.0
        %584 = vmatprep.subr.mxu0 0.0
        %585 = vmatpush1.xpose.msra.mxu0 0.0
        %586 = vmatprep.subr.mxu0 0.0
        %587 = vmatpush1.xpose.msra.mxu0 0.0
        %588 = vmatprep.subr.mxu0 0.0
        %589 = vmatpush1.xpose.msra.mxu0 0.0
        %590 = vmatprep.subr.mxu0 0.0
        %591 = vmatpush1.xpose.msra.mxu0 0.0
        %592 = vmatprep.subr.mxu0 0.0
        %593 = vmatpush1.xpose.msra.mxu0 0.0
        %594 = vmatprep.subr.mxu0 0.0
        %595 = vmatpush1.xpose.msra.mxu0 0.0
        %596 = vmatprep.subr.mxu0 0.0
        %597 = vmatpush1.xpose.msra.mxu0 0.0
        %598 = vmatprep.subr.mxu0 0.0
        %599 = vmatpush1.xpose.msra.mxu0 0.0
        %600 = vmatprep.subr.mxu0 0.0
        %601 = vmatpush1.xpose.msra.mxu0 0.0
        %602 = vmatprep.subr.mxu0 0.0
        %603 = vmatpush1.xpose.msra.mxu0 0.0
        %604 = vmatprep.subr.mxu0 0.0
        %605 = vmatpush1.xpose.msra.mxu0 0.0
        %606 = vmatprep.subr.mxu0 0.0
        %607 = vmatpush1.xpose.msra.mxu0 0.0
        %608 = vmatprep.subr.mxu0 0.0
        %609 = vmatpush1.xpose.msra.mxu0 0.0
        %610 = vmatprep.subr.mxu0 0.0
        %611 = vmatpush1.xpose.msra.mxu0 0.0
        %612 = vmatprep.mubr.f32.mxu0 0.0
        %613 = vmatmul.mubr.f32.gmra.mrb[0].mxu0 %v394
        %v614 = vpop.f32.mrb[0].mxu0
        %v615 = vadd.f32 0.0, %v614
        %v616 = vpop.f32.mrb[0].mxu0
        %617 = vmatprep.mubr.f32.mxu0 0.0
        %618 = vmatmul.mubr.f32.gmra.mrb[0].mxu0 %v395
        %v619 = vpop.f32.mrb[0].mxu0
        %v620 = vadd.f32 0.0, %v619
        %v621 = vpop.f32.mrb[0].mxu0
        %622 = vdwg.mxu0
        %623 = vmatprep.subr.mxu0 0.0
        %624 = vmatpush1.xpose.msra.mxu0 %v396
        %625 = vmatprep.subr.mxu0 0.0
        %626 = vmatpush1.xpose.msra.mxu0 %v397
        %627 = vmatprep.subr.mxu0 0.0
        %628 = vmatpush1.xpose.msra.mxu0 0.0
        %629 = vmatprep.subr.mxu0 0.0
        %630 = vmatpush1.xpose.msra.mxu0 0.0
        %631 = vmatprep.subr.mxu0 0.0
        %632 = vmatpush1.xpose.msra.mxu0 0.0
        %633 = vmatprep.subr.mxu0 0.0
        %634 = vmatpush1.xpose.msra.mxu0 0.0
        %635 = vmatprep.subr.mxu0 0.0
        %636 = vmatpush1.xpose.msra.mxu0 0.0
        %637 = vmatprep.subr.mxu0 0.0
        %638 = vmatpush1.xpose.msra.mxu0 0.0
        %639 = vmatprep.subr.mxu0 0.0
        %640 = vmatpush1.xpose.msra.mxu0 0.0
        %641 = vmatprep.subr.mxu0 0.0
        %642 = vmatpush1.xpose.msra.mxu0 0.0
        %643 = vmatprep.subr.mxu0 0.0
        %644 = vmatpush1.xpose.msra.mxu0 0.0
        %645 = vmatprep.subr.mxu0 0.0
        %646 = vmatpush1.xpose.msra.mxu0 0.0
        %647 = vmatprep.subr.mxu0 0.0
        %648 = vmatpush1.xpose.msra.mxu0 0.0
        %649 = vmatprep.subr.mxu0 0.0
        %650 = vmatpush1.xpose.msra.mxu0 0.0
        %651 = vmatprep.subr.mxu0 0.0
        %652 = vmatpush1.xpose.msra.mxu0 0.0
        %653 = vmatprep.subr.mxu0 0.0
        %654 = vmatpush1.xpose.msra.mxu0 0.0
        %655 = vmatprep.subr.mxu0 0.0
        %656 = vmatpush1.xpose.msra.mxu0 0.0
        %657 = vmatprep.subr.mxu0 0.0
        %658 = vmatpush1.xpose.msra.mxu0 0.0
        %659 = vmatprep.subr.mxu0 0.0
        %660 = vmatpush1.xpose.msra.mxu0 0.0
        %661 = vmatprep.subr.mxu0 0.0
        %662 = vmatpush1.xpose.msra.mxu0 0.0
        %663 = vmatprep.subr.mxu0 0.0
        %664 = vmatpush1.xpose.msra.mxu0 0.0
        %665 = vmatprep.subr.mxu0 0.0
        %666 = vmatpush1.xpose.msra.mxu0 0.0
        %667 = vmatprep.subr.mxu0 0.0
        %668 = vmatpush1.xpose.msra.mxu0 0.0
        %669 = vmatprep.subr.mxu0 0.0
        %670 = vmatpush1.xpose.msra.mxu0 0.0
        %671 = vmatprep.subr.mxu0 0.0
        %672 = vmatpush1.xpose.msra.mxu0 0.0
        %673 = vmatprep.subr.mxu0 0.0
        %674 = vmatpush1.xpose.msra.mxu0 0.0
        %675 = vmatprep.subr.mxu0 0.0
        %676 = vmatpush1.xpose.msra.mxu0 0.0
        %677 = vmatprep.subr.mxu0 0.0
        %678 = vmatpush1.xpose.msra.mxu0 0.0
        %679 = vmatprep.subr.mxu0 0.0
        %680 = vmatpush1.xpose.msra.mxu0 0.0
        %681 = vmatprep.subr.mxu0 0.0
        %682 = vmatpush1.xpose.msra.mxu0 0.0
        %683 = vmatprep.subr.mxu0 0.0
        %684 = vmatpush1.xpose.msra.mxu0 0.0
        %685 = vmatprep.subr.mxu0 0.0
        %686 = vmatpush1.xpose.msra.mxu0 0.0
        %687 = vmatprep.mubr.f32.mxu0 0.0
        %688 = vmatmul.mubr.f32.gmra.mrb[0].mxu0 %v396
        %v689 = vpop.f32.mrb[0].mxu0
        %v690 = vadd.f32 0.0, %v689
        %v691 = vpop.f32.mrb[0].mxu0
        %692 = vmatprep.mubr.f32.mxu0 0.0
        %693 = vmatmul.mubr.f32.gmra.mrb[0].mxu0 %v397
        %v694 = vpop.f32.mrb[0].mxu0
        %v695 = vadd.f32 0.0, %v694
        %v696 = vpop.f32.mrb[0].mxu0
        %697 = vdwg.mxu0
        %v698 = vmul.f32 %v465, 0.088388346
        %v699 = vmul.f32 %v470, 0.088388346
        %v700 = vmul.f32 %v540, 0.088388346
        %v701 = vmul.f32 %v545, 0.088388346
        %v702 = vmul.f32 %v615, 0.088388346
        %v703 = vmul.f32 %v620, 0.088388346
        %v704 = vmul.f32 %v690, 0.088388346
        %v705 = vmul.f32 %v695, 0.088388346
        %vm706 = vcmask 130048
        %v707 = vsel %vm706, %v698, -inf
        %708 = vmax.xlane.f32.xlu0 %v707
        %v709 = vpop.xlane.xlu0 %708
        %v710 = vsel %vm706, %v699, -inf
        %711 = vmax.xlane.f32.xlu0 %v710
        %v712 = vpop.xlane.xlu0 %711
        %v713 = vsel %vm706, %v700, -inf
        %714 = vmax.xlane.f32.xlu0 %v713
        %v715 = vpop.xlane.xlu0 %714
        %v716 = vsel %vm706, %v701, -inf
        %717 = vmax.xlane.f32.xlu0 %v716
        %v718 = vpop.xlane.xlu0 %717
        %v719 = vsel %vm706, %v702, -inf
        %720 = vmax.xlane.f32.xlu0 %v719
        %v721 = vpop.xlane.xlu0 %720
        %v722 = vsel %vm706, %v703, -inf
        %723 = vmax.xlane.f32.xlu0 %v722
        %v724 = vpop.xlane.xlu0 %723
        %v725 = vsel %vm706, %v704, -inf
        %726 = vmax.xlane.f32.xlu0 %v725
        %v727 = vpop.xlane.xlu0 %726
        %v728 = vsel %vm706, %v705, -inf
        %729 = vmax.xlane.f32.xlu0 %v728
        %v730 = vpop.xlane.xlu0 %729
        %v731 = vsub.f32 %v698, %v709
        %v732 = vsub.f32 %v699, %v712
        %v733 = vsub.f32 %v700, %v715
        %v734 = vsub.f32 %v701, %v718
        %v735 = vsub.f32 %v702, %v721
        %v736 = vsub.f32 %v703, %v724
        %v737 = vsub.f32 %v704, %v727
        %v738 = vsub.f32 %v705, %v730
        %v739 = vmul.f32 %v731, 1.442695
        %v740 = vpow.pop %v739
        %v741 = vmul.f32 %v732, 1.442695
        %v742 = vpow.pop %v741
        %v743 = vmul.f32 %v733, 1.442695
        %v744 = vpow.pop %v743
        %v745 = vmul.f32 %v734, 1.442695
        %v746 = vpow.pop %v745
        %v747 = vmul.f32 %v735, 1.442695
        %v748 = vpow.pop %v747
        %v749 = vmul.f32 %v736, 1.442695
        %v750 = vpow.pop %v749
        %v751 = vmul.f32 %v737, 1.442695
        %v752 = vpow.pop %v751
        %v753 = vmul.f32 %v738, 1.442695
        %v754 = vpow.pop %v753
        %v755 = vsel %vm706, %v740, 0.0
        %756 = vadd.xlane.f32.xlu0 %v755
        %v757 = vpop.xlane.xlu0 %756
        %v758 = vsel %vm706, %v742, 0.0
        %759 = vadd.xlane.f32.xlu0 %v758
        %v760 = vpop.xlane.xlu0 %759
        %v761 = vsel %vm706, %v744, 0.0
        %762 = vadd.xlane.f32.xlu0 %v761
        %v763 = vpop.xlane.xlu0 %762
        %v764 = vsel %vm706, %v746, 0.0
        %765 = vadd.xlane.f32.xlu0 %v764
        %v766 = vpop.xlane.xlu0 %765
        %v767 = vsel %vm706, %v748, 0.0
        %768 = vadd.xlane.f32.xlu0 %v767
        %v769 = vpop.xlane.xlu0 %768
        %v770 = vsel %vm706, %v750, 0.0
        %771 = vadd.xlane.f32.xlu0 %v770
        %v772 = vpop.xlane.xlu0 %771
        %v773 = vsel %vm706, %v752, 0.0
        %774 = vadd.xlane.f32.xlu0 %v773
        %v775 = vpop.xlane.xlu0 %774
        %v776 = vsel %vm706, %v754, 0.0
        %777 = vadd.xlane.f32.xlu0 %v776
        %v778 = vpop.xlane.xlu0 %777
        %v779 = vrcp.pop %v757
        %v780 = vrcp.pop %v760
        %v781 = vrcp.pop %v763
        %v782 = vrcp.pop %v766
        %v783 = vrcp.pop %v769
        %v784 = vrcp.pop %v772
        %v785 = vrcp.pop %v775
        %v786 = vrcp.pop %v778
        %v787 = vmul.f32 %v740, %v779
        %v788 = vmul.f32 %v742, %v780
        %v789 = vmul.f32 %v744, %v781
        %v790 = vmul.f32 %v746, %v782
        %v791 = vmul.f32 %v748, %v783
        %v792 = vmul.f32 %v750, %v784
        %v793 = vmul.f32 %v752, %v785
        %v794 = vmul.f32 %v754, %v786
        %v796 = vsel %vm706, %v787, 0
        %v799 = vsel %vm706, %v788, 0
        %801 = vmatprep.subr.mxu0 0.0
        %802 = vmatpush1.msra.mxu0 %v390
        %803 = vmatprep.subr.mxu0 0.0
        %804 = vmatpush1.msra.mxu0 %v391
        %805 = vmatprep.subr.mxu0 0.0
        %806 = vmatpush1.msra.mxu0 0.0
        %807 = vmatprep.subr.mxu0 0.0
        %808 = vmatpush1.msra.mxu0 0.0
        %809 = vmatprep.subr.mxu0 0.0
        %810 = vmatpush1.msra.mxu0 0.0
        %811 = vmatprep.subr.mxu0 0.0
        %812 = vmatpush1.msra.mxu0 0.0
        %813 = vmatprep.subr.mxu0 0.0
        %814 = vmatpush1.msra.mxu0 0.0
        %815 = vmatprep.subr.mxu0 0.0
        %816 = vmatpush1.msra.mxu0 0.0
        %817 = vmatprep.subr.mxu0 0.0
        %818 = vmatpush1.msra.mxu0 0.0
        %819 = vmatprep.subr.mxu0 0.0
        %820 = vmatpush1.msra.mxu0 0.0
        %821 = vmatprep.subr.mxu0 0.0
        %822 = vmatpush1.msra.mxu0 0.0
        %823 = vmatprep.subr.mxu0 0.0
        %824 = vmatpush1.msra.mxu0 0.0
        %825 = vmatprep.subr.mxu0 0.0
        %826 = vmatpush1.msra.mxu0 0.0
        %827 = vmatprep.subr.mxu0 0.0
        %828 = vmatpush1.msra.mxu0 0.0
        %829 = vmatprep.subr.mxu0 0.0
        %830 = vmatpush1.msra.mxu0 0.0
        %831 = vmatprep.subr.mxu0 0.0
        %832 = vmatpush1.msra.mxu0 0.0
        %833 = vmatprep.subr.mxu0 0.0
        %834 = vmatpush1.msra.mxu0 0.0
        %835 = vmatprep.subr.mxu0 0.0
        %836 = vmatpush1.msra.mxu0 0.0
        %837 = vmatprep.subr.mxu0 0.0
        %838 = vmatpush1.msra.mxu0 0.0
        %839 = vmatprep.subr.mxu0 0.0
        %840 = vmatpush1.msra.mxu0 0.0
        %841 = vmatprep.subr.mxu0 0.0
        %842 = vmatpush1.msra.mxu0 0.0
        %843 = vmatprep.subr.mxu0 0.0
        %844 = vmatpush1.msra.mxu0 0.0
        %845 = vmatprep.subr.mxu0 0.0
        %846 = vmatpush1.msra.mxu0 0.0
        %847 = vmatprep.subr.mxu0 0.0
        %848 = vmatpush1.msra.mxu0 0.0
        %849 = vmatprep.subr.mxu0 0.0
        %850 = vmatpush1.msra.mxu0 0.0
        %851 = vmatprep.subr.mxu0 0.0
        %852 = vmatpush1.msra.mxu0 0.0
        %853 = vmatprep.subr.mxu0 0.0
        %854 = vmatpush1.msra.mxu0 0.0
        %855 = vmatprep.subr.mxu0 0.0
        %856 = vmatpush1.msra.mxu0 0.0
        %857 = vmatprep.subr.mxu0 0.0
        %858 = vmatpush1.msra.mxu0 0.0
        %859 = vmatprep.subr.mxu0 0.0
        %860 = vmatpush1.msra.mxu0 0.0
        %861 = vmatprep.subr.mxu0 0.0
        %862 = vmatpush1.msra.mxu0 0.0
        %863 = vmatprep.subr.mxu0 0.0
        %864 = vmatpush1.msra.mxu0 0.0
        %865 = vmatprep.mubr.f32.mxu0 0.0
        %866 = vmatmul.mubr.f32.gmra.mrb[0].mxu0 %v796
        %v867 = vpop.f32.mrb[0].mxu0
        %v868 = vadd.f32 0.0, %v867
        %v869 = vpop.f32.mrb[0].mxu0
        %870 = vmatprep.mubr.f32.mxu0 0.0
        %871 = vmatmul.mubr.f32.gmra.mrb[0].mxu0 %v799
        %v872 = vpop.f32.mrb[0].mxu0
        %v873 = vadd.f32 0.0, %v872
        %v874 = vpop.f32.mrb[0].mxu0
        %875 = vdwg.mxu0
        %v877 = vsel %vm706, %v789, 0
        %v880 = vsel %vm706, %v790, 0
        %882 = vmatprep.subr.mxu0 0.0
        %883 = vmatpush1.msra.mxu0 %v392
        %884 = vmatprep.subr.mxu0 0.0
        %885 = vmatpush1.msra.mxu0 %v393
        %886 = vmatprep.subr.mxu0 0.0
        %887 = vmatpush1.msra.mxu0 0.0
        %888 = vmatprep.subr.mxu0 0.0
        %889 = vmatpush1.msra.mxu0 0.0
        %890 = vmatprep.subr.mxu0 0.0
        %891 = vmatpush1.msra.mxu0 0.0
        %892 = vmatprep.subr.mxu0 0.0
        %893 = vmatpush1.msra.mxu0 0.0
        %894 = vmatprep.subr.mxu0 0.0
        %895 = vmatpush1.msra.mxu0 0.0
        %896 = vmatprep.subr.mxu0 0.0
        %897 = vmatpush1.msra.mxu0 0.0
        %898 = vmatprep.subr.mxu0 0.0
        %899 = vmatpush1.msra.mxu0 0.0
        %900 = vmatprep.subr.mxu0 0.0
        %901 = vmatpush1.msra.mxu0 0.0
        %902 = vmatprep.subr.mxu0 0.0
        %903 = vmatpush1.msra.mxu0 0.0
        %904 = vmatprep.subr.mxu0 0.0
        %905 = vmatpush1.msra.mxu0 0.0
        %906 = vmatprep.subr.mxu0 0.0
        %907 = vmatpush1.msra.mxu0 0.0
        %908 = vmatprep.subr.mxu0 0.0
        %909 = vmatpush1.msra.mxu0 0.0
        %910 = vmatprep.subr.mxu0 0.0
        %911 = vmatpush1.msra.mxu0 0.0
        %912 = vmatprep.subr.mxu0 0.0
        %913 = vmatpush1.msra.mxu0 0.0
        %914 = vmatprep.subr.mxu0 0.0
        %915 = vmatpush1.msra.mxu0 0.0
        %916 = vmatprep.subr.mxu0 0.0
        %917 = vmatpush1.msra.mxu0 0.0
        %918 = vmatprep.subr.mxu0 0.0
        %919 = vmatpush1.msra.mxu0 0.0
        %920 = vmatprep.subr.mxu0 0.0
        %921 = vmatpush1.msra.mxu0 0.0
        %922 = vmatprep.subr.mxu0 0.0
        %923 = vmatpush1.msra.mxu0 0.0
        %924 = vmatprep.subr.mxu0 0.0
        %925 = vmatpush1.msra.mxu0 0.0
        %926 = vmatprep.subr.mxu0 0.0
        %927 = vmatpush1.msra.mxu0 0.0
        %928 = vmatprep.subr.mxu0 0.0
        %929 = vmatpush1.msra.mxu0 0.0
        %930 = vmatprep.subr.mxu0 0.0
        %931 = vmatpush1.msra.mxu0 0.0
        %932 = vmatprep.subr.mxu0 0.0
        %933 = vmatpush1.msra.mxu0 0.0
        %934 = vmatprep.subr.mxu0 0.0
        %935 = vmatpush1.msra.mxu0 0.0
        %936 = vmatprep.subr.mxu0 0.0
        %937 = vmatpush1.msra.mxu0 0.0
        %938 = vmatprep.subr.mxu0 0.0
        %939 = vmatpush1.msra.mxu0 0.0
        %940 = vmatprep.subr.mxu0 0.0
        %941 = vmatpush1.msra.mxu0 0.0
        %942 = vmatprep.subr.mxu0 0.0
        %943 = vmatpush1.msra.mxu0 0.0
        %944 = vmatprep.subr.mxu0 0.0
        %945 = vmatpush1.msra.mxu0 0.0
        %946 = vmatprep.mubr.f32.mxu0 0.0
        %947 = vmatmul.mubr.f32.gmra.mrb[0].mxu0 %v877
        %v948 = vpop.f32.mrb[0].mxu0
        %v949 = vadd.f32 0.0, %v948
        %v950 = vpop.f32.mrb[0].mxu0
        %951 = vmatprep.mubr.f32.mxu0 0.0
        %952 = vmatmul.mubr.f32.gmra.mrb[0].mxu0 %v880
        %v953 = vpop.f32.mrb[0].mxu0
        %v954 = vadd.f32 0.0, %v953
        %v955 = vpop.f32.mrb[0].mxu0
        %956 = vdwg.mxu0
        %v958 = vsel %vm706, %v791, 0
        %v961 = vsel %vm706, %v792, 0
        %963 = vmatprep.subr.mxu0 0.0
        %964 = vmatpush1.msra.mxu0 %v394
        %965 = vmatprep.subr.mxu0 0.0
        %966 = vmatpush1.msra.mxu0 %v395
        %967 = vmatprep.subr.mxu0 0.0
        %968 = vmatpush1.msra.mxu0 0.0
        %969 = vmatprep.subr.mxu0 0.0
        %970 = vmatpush1.msra.mxu0 0.0
        %971 = vmatprep.subr.mxu0 0.0
        %972 = vmatpush1.msra.mxu0 0.0
        %973 = vmatprep.subr.mxu0 0.0
        %974 = vmatpush1.msra.mxu0 0.0
        %975 = vmatprep.subr.mxu0 0.0
        %976 = vmatpush1.msra.mxu0 0.0
        %977 = vmatprep.subr.mxu0 0.0
        %978 = vmatpush1.msra.mxu0 0.0
        %979 = vmatprep.subr.mxu0 0.0
        %980 = vmatpush1.msra.mxu0 0.0
        %981 = vmatprep.subr.mxu0 0.0
        %982 = vmatpush1.msra.mxu0 0.0
        %983 = vmatprep.subr.mxu0 0.0
        %984 = vmatpush1.msra.mxu0 0.0
        %985 = vmatprep.subr.mxu0 0.0
        %986 = vmatpush1.msra.mxu0 0.0
        %987 = vmatprep.subr.mxu0 0.0
        %988 = vmatpush1.msra.mxu0 0.0
        %989 = vmatprep.subr.mxu0 0.0
        %990 = vmatpush1.msra.mxu0 0.0
        %991 = vmatprep.subr.mxu0 0.0
        %992 = vmatpush1.msra.mxu0 0.0
        %993 = vmatprep.subr.mxu0 0.0
        %994 = vmatpush1.msra.mxu0 0.0
        %995 = vmatprep.subr.mxu0 0.0
        %996 = vmatpush1.msra.mxu0 0.0
        %997 = vmatprep.subr.mxu0 0.0
        %998 = vmatpush1.msra.mxu0 0.0
        %999 = vmatprep.subr.mxu0 0.0
        %1000 = vmatpush1.msra.mxu0 0.0
        %1001 = vmatprep.subr.mxu0 0.0
        %1002 = vmatpush1.msra.mxu0 0.0
        %1003 = vmatprep.subr.mxu0 0.0
        %1004 = vmatpush1.msra.mxu0 0.0
        %1005 = vmatprep.subr.mxu0 0.0
        %1006 = vmatpush1.msra.mxu0 0.0
        %1007 = vmatprep.subr.mxu0 0.0
        %1008 = vmatpush1.msra.mxu0 0.0
        %1009 = vmatprep.subr.mxu0 0.0
        %1010 = vmatpush1.msra.mxu0 0.0
        %1011 = vmatprep.subr.mxu0 0.0
        %1012 = vmatpush1.msra.mxu0 0.0
        %1013 = vmatprep.subr.mxu0 0.0
        %1014 = vmatpush1.msra.mxu0 0.0
        %1015 = vmatprep.subr.mxu0 0.0
        %1016 = vmatpush1.msra.mxu0 0.0
        %1017 = vmatprep.subr.mxu0 0.0
        %1018 = vmatpush1.msra.mxu0 0.0
        %1019 = vmatprep.subr.mxu0 0.0
        %1020 = vmatpush1.msra.mxu0 0.0
        %1021 = vmatprep.subr.mxu0 0.0
        %1022 = vmatpush1.msra.mxu0 0.0
        %1023 = vmatprep.subr.mxu0 0.0
        %1024 = vmatpush1.msra.mxu0 0.0
        %1025 = vmatprep.subr.mxu0 0.0
        %1026 = vmatpush1.msra.mxu0 0.0
        %1027 = vmatprep.mubr.f32.mxu0 0.0
        %1028 = vmatmul.mubr.f32.gmra.mrb[0].mxu0 %v958
        %v1029 = vpop.f32.mrb[0].mxu0
        %v1030 = vadd.f32 0.0, %v1029
        %v1031 = vpop.f32.mrb[0].mxu0
        %1032 = vmatprep.mubr.f32.mxu0 0.0
        %1033 = vmatmul.mubr.f32.gmra.mrb[0].mxu0 %v961
        %v1034 = vpop.f32.mrb[0].mxu0
        %v1035 = vadd.f32 0.0, %v1034
        %v1036 = vpop.f32.mrb[0].mxu0
        %1037 = vdwg.mxu0
        %v1039 = vsel %vm706, %v793, 0
        %v1042 = vsel %vm706, %v794, 0
        %1044 = vmatprep.subr.mxu0 0.0
        %1045 = vmatpush1.msra.mxu0 %v396
        %1046 = vmatprep.subr.mxu0 0.0
        %1047 = vmatpush1.msra.mxu0 %v397
        %1048 = vmatprep.subr.mxu0 0.0
        %1049 = vmatpush1.msra.mxu0 0.0
        %1050 = vmatprep.subr.mxu0 0.0
        %1051 = vmatpush1.msra.mxu0 0.0
        %1052 = vmatprep.subr.mxu0 0.0
        %1053 = vmatpush1.msra.mxu0 0.0
        %1054 = vmatprep.subr.mxu0 0.0
        %1055 = vmatpush1.msra.mxu0 0.0
        %1056 = vmatprep.subr.mxu0 0.0
        %1057 = vmatpush1.msra.mxu0 0.0
        %1058 = vmatprep.subr.mxu0 0.0
        %1059 = vmatpush1.msra.mxu0 0.0
        %1060 = vmatprep.subr.mxu0 0.0
        %1061 = vmatpush1.msra.mxu0 0.0
        %1062 = vmatprep.subr.mxu0 0.0
        %1063 = vmatpush1.msra.mxu0 0.0
        %1064 = vmatprep.subr.mxu0 0.0
        %1065 = vmatpush1.msra.mxu0 0.0
        %1066 = vmatprep.subr.mxu0 0.0
        %1067 = vmatpush1.msra.mxu0 0.0
        %1068 = vmatprep.subr.mxu0 0.0
        %1069 = vmatpush1.msra.mxu0 0.0
        %1070 = vmatprep.subr.mxu0 0.0
        %1071 = vmatpush1.msra.mxu0 0.0
        %1072 = vmatprep.subr.mxu0 0.0
        %1073 = vmatpush1.msra.mxu0 0.0
        %1074 = vmatprep.subr.mxu0 0.0
        %1075 = vmatpush1.msra.mxu0 0.0
        %1076 = vmatprep.subr.mxu0 0.0
        %1077 = vmatpush1.msra.mxu0 0.0
        %1078 = vmatprep.subr.mxu0 0.0
        %1079 = vmatpush1.msra.mxu0 0.0
        %1080 = vmatprep.subr.mxu0 0.0
        %1081 = vmatpush1.msra.mxu0 0.0
        %1082 = vmatprep.subr.mxu0 0.0
        %1083 = vmatpush1.msra.mxu0 0.0
        %1084 = vmatprep.subr.mxu0 0.0
        %1085 = vmatpush1.msra.mxu0 0.0
        %1086 = vmatprep.subr.mxu0 0.0
        %1087 = vmatpush1.msra.mxu0 0.0
        %1088 = vmatprep.subr.mxu0 0.0
        %1089 = vmatpush1.msra.mxu0 0.0
        %1090 = vmatprep.subr.mxu0 0.0
        %1091 = vmatpush1.msra.mxu0 0.0
        %1092 = vmatprep.subr.mxu0 0.0
        %1093 = vmatpush1.msra.mxu0 0.0
        %1094 = vmatprep.subr.mxu0 0.0
        %1095 = vmatpush1.msra.mxu0 0.0
        %1096 = vmatprep.subr.mxu0 0.0
        %1097 = vmatpush1.msra.mxu0 0.0
        %1098 = vmatprep.subr.mxu0 0.0
        %1099 = vmatpush1.msra.mxu0 0.0
        %1100 = vmatprep.subr.mxu0 0.0
        %1101 = vmatpush1.msra.mxu0 0.0
        %1102 = vmatprep.subr.mxu0 0.0
        %1103 = vmatpush1.msra.mxu0 0.0
        %1104 = vmatprep.subr.mxu0 0.0
        %1105 = vmatpush1.msra.mxu0 0.0
        %1106 = vmatprep.subr.mxu0 0.0
        %1107 = vmatpush1.msra.mxu0 0.0
        %1108 = vmatprep.mubr.f32.mxu0 0.0
        %1109 = vmatmul.mubr.f32.gmra.mrb[0].mxu0 %v1039
        %v1110 = vpop.f32.mrb[0].mxu0
        %v1111 = vadd.f32 0.0, %v1110
        %v1112 = vpop.f32.mrb[0].mxu0
        %1113 = vmatprep.mubr.f32.mxu0 0.0
        %1114 = vmatmul.mubr.f32.gmra.mrb[0].mxu0 %v1042
        %v1115 = vpop.f32.mrb[0].mxu0
        %v1116 = vadd.f32 0.0, %v1115
        %v1117 = vpop.f32.mrb[0].mxu0
        %1118 = vdwg.mxu0
        %v1119 = vadd.f32 %v215, %v868
        %v1120 = vadd.f32 %v216, %v873
        %v1121 = vadd.f32 %v217, %v949
        %v1122 = vadd.f32 %v218, %v954
        %v1123 = vadd.f32 %v219, %v1030
        %v1124 = vadd.f32 %v220, %v1035
        %v1125 = vadd.f32 %v221, %v1111
        %v1126 = vadd.f32 %v222, %v1116
        %1127 = vst [vmem:[%s212] sm:$0xff] %v1119
        %1128 = vst [vmem:[%s212 + $0x8] sm:$0xff] %v1120
        %1129 = vst [vmem:[%s212 + $0x10] sm:$0xff] %v1121
        %1130 = vst [vmem:[%s212 + $0x18] sm:$0xff] %v1122
        %1131 = vst [vmem:[%s212 + $0x20] sm:$0xff] %v1123
        %1132 = vst [vmem:[%s212 + $0x28] sm:$0xff] %v1124
        %1133 = vst [vmem:[%s212 + $0x30] sm:$0xff] %v1125
        %1134 = vst [vmem:[%s212 + $0x38] sm:$0xff] %v1126
        %s1135 = sand.u32 %s95, 1
        %s1136 = scalar_lea.sflag [#allocation4], %s1135
        %s1137 = sand.u32 %s95, 1
        %s1138 = smul.addr %s1137, 64
        %s1139 = scalar_lea.vmem [#allocation8], %s1138
        // Predicated region
        $region45: #{tpu_custom_call.1} parent=31 // pred_check
          %p1140 = pneg %p105
        $region46: #{tpu_custom_call.1} parent=31 // pred_check_branch
          %1142 = sbr.rel (%p1140) target = $region48
        $region47: #{tpu_custom_call.1} parent=31 // pred_region
          %s1143 = smul.u32 4, %s19
          %s1145 = ssub.s32 1024, 1024
          %1146 = vsyncadd %s1136, %s1145
          %s1147 = smul.addr %s1143, 2
          %s1148 = smul.addr %s1147, 128
          %s1149 = scalar_lea.hbm %s3, %s1148
          %s1150 = sshll.u32 %s1139, 4
          %s1151 = int_to_ptr.vmem [resolvable:$true] %s1150
          %1156 = dma.vmem_to_hbm [thread:$0]  %s1151, 1024, %s1149, %s1136, 128, 128, 8
        $region48: #{tpu_custom_call.1} parent=31 // pred_fallthru
          _
      $region32: #{tpu_custom_call.1} parent=5 // pred_fallthru
        _
      %p1157 = scmp.le.s32.totalorder 2, %s14
      // Predicated region
      $region49: #{tpu_custom_call.1} parent=5 // pred_check
        %p1158 = pneg %p1157
      $region50: #{tpu_custom_call.1} parent=5 // pred_check_branch
        %1160 = sbr.rel (%p1158) target = $region52
      $region51: #{tpu_custom_call.1} parent=5 // pred_region
        %s1161 = ssub.s32 %s14, 2
        // Predicated region
        $region53: #{tpu_custom_call.1} parent=51 // pred_check
          %p1162 = pneg %p111
        $region54: #{tpu_custom_call.1} parent=51 // pred_check_branch
          %1164 = sbr.rel (%p1162) target = $region56
        $region55: #{tpu_custom_call.1} parent=51 // pred_region
          %s1165 = sand.u32 %s96, 1
          %s1166 = scalar_lea.sflag [#allocation4], %s1165
          %s1167 = sand.u32 %s96, 1
          %s1168 = smul.addr %s1167, 64
          %s1169 = scalar_lea.vmem [#allocation8], %s1168
          %1170 = dma.done %s1166, 1024
        $region56: #{tpu_custom_call.1} parent=51 // pred_fallthru
          _
      $region52: #{tpu_custom_call.1} parent=5 // pred_fallthru
        _
    $region6: #{tpu_custom_call.1} parent=1 // loop_footer
      %s18 = sadd.s32 1, %s14
    $region7: #{tpu_custom_call.1} parent=1 // loop_footer_branch
      %13 = sbr.rel target = $region3
    $region8: #{tpu_custom_call.1} parent=1 // loop_exit
      _
    %1171 = vsyncpa [#allocation3], 1
    %s1172 = scalar_lea.sflag [#allocation3], 1
    %1173 = vsyncpa %s1172, 1
    %1174 = vsyncpa [#allocation6], 1
    %1175 = vsyncpa [#allocation4], 1
    %s1176 = scalar_lea.sflag [#allocation4], 1
    %1177 = vsyncpa %s1176, 1

</llo_original>
